<compile_context>
chip_gen: v7x
topology: tpu7x:2x2x1
jax: 0.10.0
libtpu: 0.0.40
codegen_flags: <defaults>
</compile_context>

<pallas_src>
import functools
import math

import jax
import jax.numpy as jnp
from jax.experimental import pallas as pl
from jax.experimental.pallas import tpu as pltpu


# ---------------------------------------------------------------------------
# tanh-approximation gelu, identical formula to the torch module's gelu()
# ---------------------------------------------------------------------------
_GELU_C = math.sqrt(2.0 / math.pi)


def _tanh_gelu(x):
    return 0.5 * x * (1.0 + jnp.tanh(_GELU_C * (x + 0.044715 * (x * x * x))))


def _round_up(a, b):
    return (a + b - 1) // b * b


def _cdiv(a, b):
    return (a + b - 1) // b


def _usable_vmem_bytes():
    """Generation-aware usable VMEM (leave ~3/8 headroom for Mosaic internal scratch)."""
    try:
        cap = int(pltpu.get_tpu_info().vmem_capacity_bytes)   # 128 MiB v5e/v6e, 64 MiB v7x
    except Exception:
        cap = 64 * 1024 * 1024
    return (cap * 5) // 8


# ---------------------------------------------------------------------------
# Kernels
# ---------------------------------------------------------------------------
def _ffn_kernel_resident(x_ref, w1_ref, b1_ref, w2_ref, b2_ref, o_ref, *,
                         low_precision_gelu):
    """Weights fully VMEM-resident; grid iterates over token tiles only."""
    h = jnp.dot(x_ref[...], w1_ref[...], preferred_element_type=jnp.float32) + b1_ref[...]
    if low_precision_gelu:
        h = _tanh_gelu(h.astype(w2_ref.dtype))        # bf16 GELU (v6e/v7x have bf16 VPU/EUP)
    else:
        h = _tanh_gelu(h).astype(w2_ref.dtype)        # f32 GELU (exact / v5e)
    y = jnp.dot(h, w2_ref[...], preferred_element_type=jnp.float32) + b2_ref[...]
    o_ref[...] = y.astype(o_ref.dtype)


def _ffn_kernel_tiled(x_ref, w1_ref, b1_ref, w2_ref, b2_ref, o_ref, *,
                      low_precision_gelu):
    """d_ff tiled (reduction axis j): accumulate directly into the resident output block."""
    j = pl.program_id(1)

    @pl.when(j == 0)
    def _init():
        o_ref[...] = jnp.zeros_like(o_ref)

    # bias1 for THIS d_ff tile only -> each hidden unit gets its bias exactly once
    h = jnp.dot(x_ref[...], w1_ref[...], preferred_element_type=jnp.float32) + b1_ref[...]
    if low_precision_gelu:
        h = _tanh_gelu(h.astype(w2_ref.dtype))
    else:
        h = _tanh_gelu(h).astype(w2_ref.dtype)
    o_ref[...] += jnp.dot(h, w2_ref[...], preferred_element_type=jnp.float32)

    @pl.when(j == pl.num_programs(1) - 1)
    def _finalize():
        o_ref[...] += b2_ref[...]


# ---------------------------------------------------------------------------
# Wrapper
# ---------------------------------------------------------------------------
def poswise_feed_forward(x, ffn_params, *, use_bf16=True, bf16_gelu=True,
                         tm_max=512, tf_max=512):
    """x: (B, S, d_embed).  ffn_params: pre-transposed weights (see prepare_ffn_params).

    use_bf16:  bf16 MXU operands, f32 accumulation (default; big win on v6e/v7x).
    bf16_gelu: compute GELU/bias in bf16 when use_bf16 (set False on v5e / strict accuracy).
    """
    B, S, d_embed = x.shape
    w1t = ffn_params["w1t"]            # (d_embed, d_ff)
    b1 = ffn_params["b1"]              # (d_ff,)
    w2t = ffn_params["w2t"]            # (d_ff, d_embed)
    b2 = ffn_params["b2"]              # (d_embed,)
    d_ff = w1t.shape[1]

    M = B * S
    cdtype = jnp.bfloat16 if use_bf16 else x.dtype
    itemsize = jnp.dtype(cdtype).itemsize
    sublane = 16 if jnp.dtype(cdtype) == jnp.dtype(jnp.bfloat16) else 8
    low_gelu = bool(use_bf16 and bf16_gelu)

    x2 = x.reshape(M, d_embed).astype(cdtype)
    w1t = w1t.astype(cdtype)
    w2t = w2t.astype(cdtype)
    b1 = b1.reshape(1, d_ff).astype(jnp.float32)
    b2 = b2.reshape(1, d_embed).astype(jnp.float32)

    usable_vmem = _usable_vmem_bytes()

    # --- token tile: minimize padding; keep >= 2 tiles when possible (v7x has 2 TCs) ------
    nt = _cdiv(M, tm_max)
    if nt == 1 and M >= 2 * sublane:
        nt = 2
    tm = _round_up(_cdiv(M, nt), sublane)
    M_pad = nt * tm
    if M_pad != M:
        x2 = jnp.pad(x2, ((0, M_pad - M), (0, 0)))

    x_blk = tm * d_embed * itemsize
    o_blk = tm * d_embed * 4

    # --- can both weight matrices live in VMEM? (worst case: double-buffered) -------------
    w_bytes = 2 * d_embed * d_ff * itemsize
    bias_bytes = (d_ff + d_embed) * 4
    resident_need = 2 * (w_bytes + bias_bytes + x_blk + o_blk)
    resident = resident_need <= usable_vmem

    if resident:
        grid = (nt,)
        dim_sem = ("parallel",)
        kernel = functools.partial(_ffn_kernel_resident, low_precision_gelu=low_gelu)
        vmem_need = resident_need

        def make_specs(single_buffer):
            def inv_spec(shape):
                # grid-invariant operand: fetched once; single-buffer it when supported
                if single_buffer:
                    return pl.BlockSpec(shape, lambda i: (0, 0),
                                        pipeline_mode=pl.Buffered(1))
                return pl.BlockSpec(shape, lambda i: (0, 0))
            in_specs = [
                pl.BlockSpec((tm, d_embed), lambda i: (i, 0)),   # x
                inv_spec((d_embed, d_ff)),                       # W1t (resident)
                inv_spec((1, d_ff)),                             # b1
                inv_spec((d_ff, d_embed)),                       # W2t (resident)
                inv_spec((1, d_embed)),                          # b2
            ]
            out_specs = pl.BlockSpec((tm, d_embed), lambda i: (i, 0))
            return in_specs, out_specs
    else:
        # d_ff (reduction) tile: multiple of 128 lanes; zero-pad d_ff (exact: gelu(0)=0
        # hidden units multiply zero W2 rows).
        tf = min(_round_up(tf_max, 128), _round_up(d_ff, 128))
        F_pad = _round_up(d_ff, tf)
        if F_pad != d_ff:
            w1t = jnp.pad(w1t, ((0, 0), (0, F_pad - d_ff)))
            b1 = jnp.pad(b1, ((0, 0), (0, F_pad - d_ff)))
            w2t = jnp.pad(w2t, ((0, F_pad - d_ff), (0, 0)))

        grid = (nt, F_pad // tf)
        dim_sem = ("parallel", "arbitrary")
        kernel = functools.partial(_ffn_kernel_tiled, low_precision_gelu=low_gelu)
        vmem_need = 2 * (x_blk + d_embed * tf * itemsize + tf * 4
                         + tf * d_embed * itemsize + d_embed * 4 + o_blk)

        def make_specs(single_buffer):
            if single_buffer:
                b2_spec = pl.BlockSpec((1, d_embed), lambda i, j: (0, 0),
                                       pipeline_mode=pl.Buffered(1))
            else:
                b2_spec = pl.BlockSpec((1, d_embed), lambda i, j: (0, 0))
            in_specs = [
                pl.BlockSpec((tm, d_embed), lambda i, j: (i, 0)),   # x
                pl.BlockSpec((d_embed, tf), lambda i, j: (0, j)),   # W1t tile
                pl.BlockSpec((1, tf), lambda i, j: (0, j)),         # b1 tile
                pl.BlockSpec((tf, d_embed), lambda i, j: (j, 0)),   # W2t tile
                b2_spec,                                            # b2 (grid-invariant)
            ]
            out_specs = pl.BlockSpec((tm, d_embed), lambda i, j: (i, 0))
            return in_specs, out_specs

    vmem_limit = int(min(max(vmem_need * 5 // 4, 32 * 1024 * 1024), usable_vmem))
    compiler_params = pltpu.CompilerParams(
        dimension_semantics=dim_sem, vmem_limit_bytes=vmem_limit)
    out_shape = jax.ShapeDtypeStruct((M_pad, d_embed), jnp.float32)

    def build(single_buffer):
        in_specs, out_specs = make_specs(single_buffer)
        return pl.pallas_call(
            kernel,
            out_shape=out_shape,
            grid_spec=pltpu.PrefetchScalarGridSpec(
                num_scalar_prefetch=0, grid=grid,
                in_specs=in_specs, out_specs=out_specs),
            compiler_params=compiler_params,
        )

    try:
        out = build(True)(x2, w1t, b1, w2t, b2)
    except Exception:
        # pl.Buffered(1) on grid-invariant operands not supported on this jax version:
        # fall back to default double buffering (correctness identical).
        out = build(False)(x2, w1t, b1, w2t, b2)

    out = out[:M].reshape(B, S, d_embed).astype(x.dtype)
    # TODO(synk): dropout is identity in eval mode; training-mode dropout not implemented.
    return out


# ---------------------------------------------------------------------------
# Parameter handling (torch Conv1d layout  ->  pre-transposed matmul layout)
# ---------------------------------------------------------------------------
def init_torch_params(key, d_embed, d_ff):
    """Mimic nn.Conv1d(kernel_size=1) default init; weights stored torch-style (out, in, 1)."""
    k1w, k1b, k2w, k2b = jax.random.split(key, 4)
    bound1 = 1.0 / math.sqrt(d_embed)   # fan_in = in_channels * kernel_size
    bound2 = 1.0 / math.sqrt(d_ff)
    return {
        "conv1_w": jax.random.uniform(k1w, (d_ff, d_embed, 1), jnp.float32, -bound1, bound1),
        "conv1_b": jax.random.uniform(k1b, (d_ff,), jnp.float32, -bound1, bound1),
        "conv2_w": jax.random.uniform(k2w, (d_embed, d_ff, 1), jnp.float32, -bound2, bound2),
        "conv2_b": jax.random.uniform(k2b, (d_embed,), jnp.float32, -bound2, bound2),
    }


def prepare_ffn_params(torch_params):
    """Done ONCE outside the hot path: squeeze kernel dim and pre-transpose to (d_in, d_out)."""
    w1 = torch_params["conv1_w"][..., 0]        # (d_ff, d_embed)
    w2 = torch_params["conv2_w"][..., 0]        # (d_embed, d_ff)
    return {
        "w1t": jnp.asarray(w1.T),               # (d_embed, d_ff)
        "b1": jnp.asarray(torch_params["conv1_b"]),
        "w2t": jnp.asarray(w2.T),               # (d_ff, d_embed)
        "b2": jnp.asarray(torch_params["conv2_b"]),
    }


def reference_ffn(x, torch_params):
    """Pure-JAX reference with identical math (conv1d k=1 == linear)."""
    w1 = torch_params["conv1_w"][..., 0]
    w2 = torch_params["conv2_w"][..., 0]
    h = jnp.einsum("bsd,fd->bsf", x, w1) + torch_params["conv1_b"]
    h = _tanh_gelu(h)
    y = jnp.einsum("bsf,df->bsd", h, w2) + torch_params["conv2_b"]
    return y


if __name__ == "__main__":
    # small config: batch=2, seq=8, d_embed=32, d_ff=128 (4 * d_embed)
    B, S, d_embed, d_ff = 2, 8, 32, 128

    key = jax.random.PRNGKey(0)
    kp, kx = jax.random.split(key, 2)

    torch_params = init_torch_params(kp, d_embed, d_ff)
    ffn_params = prepare_ffn_params(torch_params)
    x = jax.random.normal(kx, (B, S, d_embed), jnp.float32)

    ref = reference_ffn(x, torch_params)

    # exact-math path (f32 operands) -- tight tolerance vs the pure-JAX reference
    out_f32 = poswise_feed_forward(x, ffn_params, use_bf16=False)
    jax.block_until_ready(out_f32)
    assert out_f32.shape == (B, S, d_embed)
    assert jnp.allclose(out_f32, ref, rtol=1e-4, atol=1e-4), (
        f"f32 max abs err {jnp.max(jnp.abs(out_f32 - ref))}")

    # default fast path (bf16 MXU operands + bf16 GELU, f32 accumulation) -- looser tolerance
    out_bf16 = poswise_feed_forward(x, ffn_params, use_bf16=True)
    jax.block_until_ready(out_bf16)
    assert out_bf16.shape == (B, S, d_embed)
    assert jnp.allclose(out_bf16, ref, rtol=5e-2, atol=5e-2), (
        f"bf16 max abs err {jnp.max(jnp.abs(out_bf16 - ref))}")

    print("KERNEL_OK")
</pallas_src>

<mosaic_0001>
module attributes {stable_mosaic.version = 11 : i64} {
  func.func @_ffn_kernel_resident(%arg0: i32, %arg1: memref<8x32xf32, #tpu.memory_space<vmem>>, %arg2: memref<32x128xf32, #tpu.memory_space<vmem>>, %arg3: memref<1x128xf32, #tpu.memory_space<vmem>>, %arg4: memref<128x32xf32, #tpu.memory_space<vmem>>, %arg5: memref<1x32xf32, #tpu.memory_space<vmem>>, %arg6: memref<8x32xf32, #tpu.memory_space<vmem>>) attributes {dimension_semantics = [#tpu.dimension_semantics<parallel>], iteration_bounds = array<i64: 2>, scalar_prefetch = 0 : i64, scratch_operands = 0 : i64, tpu.core_type = #tpu.core_type<tc>, window_params = [{transform_indices = @transform_0, window_bounds = array<i64: 8, 32>}, {pipeline_mode = #tpu.pipeline_mode<synchronous>, transform_indices = @transform_1, window_bounds = array<i64: 32, 128>}, {pipeline_mode = #tpu.pipeline_mode<synchronous>, transform_indices = @transform_2, window_bounds = array<i64: 1, 128>}, {pipeline_mode = #tpu.pipeline_mode<synchronous>, transform_indices = @transform_3, window_bounds = array<i64: 128, 32>}, {pipeline_mode = #tpu.pipeline_mode<synchronous>, transform_indices = @transform_4, window_bounds = array<i64: 1, 32>}, {transform_indices = @transform_5, window_bounds = array<i64: 8, 32>}]} {
    %c0 = arith.constant 0 : index
    %c0_0 = arith.constant 0 : index
    %0 = vector.load %arg1[%c0, %c0_0] : memref<8x32xf32, #tpu.memory_space<vmem>>, vector<8x32xf32>
    %c0_1 = arith.constant 0 : index
    %c0_2 = arith.constant 0 : index
    %1 = vector.load %arg2[%c0_1, %c0_2] : memref<32x128xf32, #tpu.memory_space<vmem>>, vector<32x128xf32>
    %cst = arith.constant dense<0.000000e+00> : vector<8x128xf32>
    %2 = tpu.matmul %0, %1, %cst {dimension_numbers = #tpu.dot_dimension_numbers<[1], [0], [0], [1], [0, 0, 1, 1], [], []>} : vector<8x32xf32>, vector<32x128xf32>, vector<8x128xf32> -> vector<8x128xf32>
    %c0_3 = arith.constant 0 : index
    %c0_4 = arith.constant 0 : index
    %3 = vector.load %arg3[%c0_3, %c0_4] : memref<1x128xf32, #tpu.memory_space<vmem>>, vector<1x128xf32>
    %4 = vector.broadcast %3 : vector<1x128xf32> to vector<8x128xf32>
    %5 = arith.addf %2, %4 : vector<8x128xf32>
    %cst_5 = arith.constant 5.000000e-01 : f32
    %6 = vector.broadcast %cst_5 : f32 to vector<8x128xf32>
    %7 = arith.mulf %6, %5 : vector<8x128xf32>
    %8 = arith.mulf %5, %5 : vector<8x128xf32>
    %9 = arith.mulf %8, %5 : vector<8x128xf32>
    %cst_6 = arith.constant 4.471500e-02 : f32
    %10 = vector.broadcast %cst_6 : f32 to vector<8x128xf32>
    %11 = arith.mulf %10, %9 : vector<8x128xf32>
    %12 = arith.addf %5, %11 : vector<8x128xf32>
    %cst_7 = arith.constant 0.797884583 : f32
    %13 = vector.broadcast %cst_7 : f32 to vector<8x128xf32>
    %14 = arith.mulf %13, %12 : vector<8x128xf32>
    %15 = math.tanh %14 : vector<8x128xf32>
    %cst_8 = arith.constant 1.000000e+00 : f32
    %16 = vector.broadcast %cst_8 : f32 to vector<8x128xf32>
    %17 = arith.addf %16, %15 : vector<8x128xf32>
    %18 = arith.mulf %7, %17 : vector<8x128xf32>
    %c0_9 = arith.constant 0 : index
    %c0_10 = arith.constant 0 : index
    %19 = vector.load %arg4[%c0_9, %c0_10] : memref<128x32xf32, #tpu.memory_space<vmem>>, vector<128x32xf32>
    %cst_11 = arith.constant dense<0.000000e+00> : vector<8x32xf32>
    %20 = tpu.matmul %18, %19, %cst_11 {dimension_numbers = #tpu.dot_dimension_numbers<[1], [0], [0], [1], [0, 0, 1, 1], [], []>} : vector<8x128xf32>, vector<128x32xf32>, vector<8x32xf32> -> vector<8x32xf32>
    %c0_12 = arith.constant 0 : index
    %c0_13 = arith.constant 0 : index
    %21 = vector.load %arg5[%c0_12, %c0_13] : memref<1x32xf32, #tpu.memory_space<vmem>>, vector<1x32xf32>
    %22 = vector.broadcast %21 : vector<1x32xf32> to vector<8x32xf32>
    %23 = arith.addf %20, %22 : vector<8x32xf32>
    %c0_14 = arith.constant 0 : index
    %c0_15 = arith.constant 0 : index
    %24 = vector.load %arg6[%c0_14, %c0_15] : memref<8x32xf32, #tpu.memory_space<vmem>>, vector<8x32xf32>
    tpu.vector_store %arg6[%c0_14, %c0_15], %23 {strides = array<i32>} : memref<8x32xf32, #tpu.memory_space<vmem>>, vector<8x32xf32>,
    return
  }
  func.func @transform_0(%arg0: i32) -> (i32, i32) {
    %c0_i32 = arith.constant 0 : i32
    %c0_i32_0 = arith.constant 0 : i32
    return %arg0, %c0_i32 : i32, i32
  }
  func.func @transform_1(%arg0: i32) -> (i32, i32) {
    %c0_i32 = arith.constant 0 : i32
    %c0_i32_0 = arith.constant 0 : i32
    %c0_i32_1 = arith.constant 0 : i32
    return %c0_i32, %c0_i32_0 : i32, i32
  }
  func.func @transform_2(%arg0: i32) -> (i32, i32) {
    %c0_i32 = arith.constant 0 : i32
    %c0_i32_0 = arith.constant 0 : i32
    %c0_i32_1 = arith.constant 0 : i32
    return %c0_i32, %c0_i32_0 : i32, i32
  }
  func.func @transform_3(%arg0: i32) -> (i32, i32) {
    %c0_i32 = arith.constant 0 : i32
    %c0_i32_0 = arith.constant 0 : i32
    %c0_i32_1 = arith.constant 0 : i32
    return %c0_i32, %c0_i32_0 : i32, i32
  }
  func.func @transform_4(%arg0: i32) -> (i32, i32) {
    %c0_i32 = arith.constant 0 : i32
    %c0_i32_0 = arith.constant 0 : i32
    %c0_i32_1 = arith.constant 0 : i32
    return %c0_i32, %c0_i32_0 : i32, i32
  }
  func.func @transform_5(%arg0: i32) -> (i32, i32) {
    %c0_i32 = arith.constant 0 : i32
    %c0_i32_0 = arith.constant 0 : i32
    return %arg0, %c0_i32 : i32, i32
  }
}

module attributes {stable_mosaic.version = 11 : i64} {
  func.func @_ffn_kernel_resident(%arg0: i32, %arg1: memref<8x32xf32, #tpu.memory_space<vmem>>, %arg2: memref<32x128xf32, #tpu.memory_space<vmem>>, %arg3: memref<1x128xf32, #tpu.memory_space<vmem>>, %arg4: memref<128x32xf32, #tpu.memory_space<vmem>>, %arg5: memref<1x32xf32, #tpu.memory_space<vmem>>, %arg6: memref<8x32xf32, #tpu.memory_space<vmem>>) attributes {dimension_semantics = [#tpu.dimension_semantics<parallel>], iteration_bounds = array<i64: 2>, scalar_prefetch = 0 : i64, scratch_operands = 0 : i64, tpu.core_type = #tpu.core_type<tc>, window_params = [{transform_indices = @transform_0, window_bounds = array<i64: 8, 32>}, {pipeline_mode = #tpu.pipeline_mode<synchronous>, transform_indices = @transform_1, window_bounds = array<i64: 32, 128>}, {pipeline_mode = #tpu.pipeline_mode<synchronous>, transform_indices = @transform_2, window_bounds = array<i64: 1, 128>}, {pipeline_mode = #tpu.pipeline_mode<synchronous>, transform_indices = @transform_3, window_bounds = array<i64: 128, 32>}, {pipeline_mode = #tpu.pipeline_mode<synchronous>, transform_indices = @transform_4, window_bounds = array<i64: 1, 32>}, {transform_indices = @transform_5, window_bounds = array<i64: 8, 32>}]} {
    %c0 = arith.constant 0 : index
    %c0_0 = arith.constant 0 : index
    %0 = vector.load %arg1[%c0, %c0_0] : memref<8x32xf32, #tpu.memory_space<vmem>>, vector<8x32xf32>
    %c0_1 = arith.constant 0 : index
    %c0_2 = arith.constant 0 : index
    %1 = vector.load %arg2[%c0_1, %c0_2] : memref<32x128xf32, #tpu.memory_space<vmem>>, vector<32x128xf32>
    %cst = arith.constant dense<0.000000e+00> : vector<8x128xf32>
    %2 = tpu.matmul %0, %1, %cst {dimension_numbers = #tpu.dot_dimension_numbers<[1], [0], [0], [1], [0, 0, 1, 1], [], []>} : vector<8x32xf32>, vector<32x128xf32>, vector<8x128xf32> -> vector<8x128xf32>
    %c0_3 = arith.constant 0 : index
    %c0_4 = arith.constant 0 : index
    %3 = vector.load %arg3[%c0_3, %c0_4] : memref<1x128xf32, #tpu.memory_space<vmem>>, vector<1x128xf32>
    %4 = vector.broadcast %3 : vector<1x128xf32> to vector<8x128xf32>
    %5 = arith.addf %2, %4 : vector<8x128xf32>
    %cst_5 = arith.constant 5.000000e-01 : f32
    %6 = vector.broadcast %cst_5 : f32 to vector<8x128xf32>
    %7 = arith.mulf %6, %5 : vector<8x128xf32>
    %8 = arith.mulf %5, %5 : vector<8x128xf32>
    %9 = arith.mulf %8, %5 : vector<8x128xf32>
    %cst_6 = arith.constant 4.471500e-02 : f32
    %10 = vector.broadcast %cst_6 : f32 to vector<8x128xf32>
    %11 = arith.mulf %10, %9 : vector<8x128xf32>
    %12 = arith.addf %5, %11 : vector<8x128xf32>
    %cst_7 = arith.constant 0.797884583 : f32
    %13 = vector.broadcast %cst_7 : f32 to vector<8x128xf32>
    %14 = arith.mulf %13, %12 : vector<8x128xf32>
    %15 = math.tanh %14 : vector<8x128xf32>
    %cst_8 = arith.constant 1.000000e+00 : f32
    %16 = vector.broadcast %cst_8 : f32 to vector<8x128xf32>
    %17 = arith.addf %16, %15 : vector<8x128xf32>
    %18 = arith.mulf %7, %17 : vector<8x128xf32>
    %c0_9 = arith.constant 0 : index
    %c0_10 = arith.constant 0 : index
    %19 = vector.load %arg4[%c0_9, %c0_10] : memref<128x32xf32, #tpu.memory_space<vmem>>, vector<128x32xf32>
    %cst_11 = arith.constant dense<0.000000e+00> : vector<8x32xf32>
    %20 = tpu.matmul %18, %19, %cst_11 {dimension_numbers = #tpu.dot_dimension_numbers<[1], [0], [0], [1], [0, 0, 1, 1], [], []>} : vector<8x128xf32>, vector<128x32xf32>, vector<8x32xf32> -> vector<8x32xf32>
    %c0_12 = arith.constant 0 : index
    %c0_13 = arith.constant 0 : index
    %21 = vector.load %arg5[%c0_12, %c0_13] : memref<1x32xf32, #tpu.memory_space<vmem>>, vector<1x32xf32>
    %22 = vector.broadcast %21 : vector<1x32xf32> to vector<8x32xf32>
    %23 = arith.addf %20, %22 : vector<8x32xf32>
    %c0_14 = arith.constant 0 : index
    %c0_15 = arith.constant 0 : index
    %24 = vector.load %arg6[%c0_14, %c0_15] : memref<8x32xf32, #tpu.memory_space<vmem>>, vector<8x32xf32>
    tpu.vector_store %arg6[%c0_14, %c0_15], %23 {strides = array<i32>} : memref<8x32xf32, #tpu.memory_space<vmem>>, vector<8x32xf32>,
    return
  }
  func.func @transform_0(%arg0: i32) -> (i32, i32) {
    %c0_i32 = arith.constant 0 : i32
    %c0_i32_0 = arith.constant 0 : i32
    return %arg0, %c0_i32 : i32, i32
  }
  func.func @transform_1(%arg0: i32) -> (i32, i32) {
    %c0_i32 = arith.constant 0 : i32
    %c0_i32_0 = arith.constant 0 : i32
    %c0_i32_1 = arith.constant 0 : i32
    return %c0_i32, %c0_i32_0 : i32, i32
  }
  func.func @transform_2(%arg0: i32) -> (i32, i32) {
    %c0_i32 = arith.constant 0 : i32
    %c0_i32_0 = arith.constant 0 : i32
    %c0_i32_1 = arith.constant 0 : i32
    return %c0_i32, %c0_i32_0 : i32, i32
  }
  func.func @transform_3(%arg0: i32) -> (i32, i32) {
    %c0_i32 = arith.constant 0 : i32
    %c0_i32_0 = arith.constant 0 : i32
    %c0_i32_1 = arith.constant 0 : i32
    return %c0_i32, %c0_i32_0 : i32, i32
  }
  func.func @transform_4(%arg0: i32) -> (i32, i32) {
    %c0_i32 = arith.constant 0 : i32
    %c0_i32_0 = arith.constant 0 : i32
    %c0_i32_1 = arith.constant 0 : i32
    return %c0_i32, %c0_i32_0 : i32, i32
  }
  func.func @transform_5(%arg0: i32) -> (i32, i32) {
    %c0_i32 = arith.constant 0 : i32
    %c0_i32_0 = arith.constant 0 : i32
    return %arg0, %c0_i32 : i32, i32
  }
}

</mosaic_0001>

<llo_original>
// kernel: tpu_custom_call.1
$region0: #{tpu_custom_call.1}
  #allocation0 [shape = 'u32[]', space=smem, size = 0x4, offset = 0x4, fixed_abs, tag = 'smem constant byte address 0x4 - core index']
  #allocation1 [shape = 'u32[144,128]{1,0:T(1,128)}', space=vmem, size = 0x12000, scoped, tag = 'internal scratch']
  %s0 = inlined_call_operand.vmem [shape: f32[16,32], index: 0, kind: input, shape index: {}]
  %s1 = inlined_call_operand.vmem [shape: f32[32,128], index: 1, kind: input, shape index: {}]
  %s2 = inlined_call_operand.vmem [shape: f32[1,128], index: 2, kind: input, shape index: {}]
  %s3 = inlined_call_operand.vmem [shape: f32[128,32], index: 3, kind: input, shape index: {}]
  %s4 = inlined_call_operand.vmem [shape: f32[1,32], index: 4, kind: input, shape index: {}]
  %s5 = inlined_call_operand.hbm [shape: f32[16,32], index: 5, kind: output, shape index: {}]
  %s6 = sld [smem:[#allocation0]]
  $region53: #{tpu_custom_call.1} parent=0
    _
  %s8 = ssub.s32 1, %s6
  %s9 = scalar_select 0, %s8, %s6
  $region1: #{tpu_custom_call.1} parent=0
    #allocation2 [shape = 'u8[8192]{0}', space=vmem, size = 0x2000, scoped, tag = 'output window, operand 0']
    #allocation3 [shape = 's32[2]{0}', space=sflag, size = 0x8, scoped, tag = 'scoped memory for tpu_custom_call.1']
    %10 = vsyncpa [#allocation3], 0
    %s11 = scalar_lea.sflag [#allocation3], 1
    %12 = vsyncpa %s11, 0
    loop: start=0, step=1, limit=4
    $region2: #{tpu_custom_call.1} parent=1 // loop_pre_header
      _
    $region3: #{tpu_custom_call.1} parent=1 // loop_header
      %s14 = sphi 0, %s18
      %p15 = scmp.ge.s32.totalorder %s14, 4
      %s24 = sphi 0, %s26
      %s27 = sphi 0, %s24
      %s28 = sphi 0, %s27
      %s44 = sphi 0, %s28
      %s48 = sphi 0, %s48
      %s50 = sphi 0, %s48
      %s51 = sphi 0, %s50
      %s65 = sphi 0, %s51
      %s69 = sphi 0, %s69
      %s71 = sphi 0, %s69
      %s72 = sphi 0, %s71
      %s86 = sphi 0, %s72
      %s90 = sphi 0, %s90
      %s92 = sphi 0, %s90
      %s93 = sphi 0, %s92
      %s107 = sphi 0, %s93
      %s111 = sphi 0, %s111
      %s113 = sphi 0, %s111
      %s114 = sphi 0, %s113
      %s128 = sphi 0, %s114
      %s134 = sphi 0, %s136
      %s137 = sphi 0, %s134
      %s138 = sphi 0, %s137
      %s154 = sphi 0, %s138
    $region4: #{tpu_custom_call.1} parent=1 // loop_header_branch
      %17 = sbr.rel (%p15) target = $region8
    $region5: #{tpu_custom_call.1} parent=1 // loop_body
      %s19 = ssub.s32 %s14, 1
      %s20 = ssub.s32 %s14, 2
      %s21 = sadd.s32 %s14, 1
      %s22 = ssub.s32 %s14, %s21
      %p23 = scmp.eq.s32.totalorder %s22, 0
      %s25 = sadd.s32 %s24, 1
      %s26 = scalar_select %p23, %s24, %s25
      %p29 = pneg %p23
      %p30 = scmp.eq.s32.totalorder %s14, 1
      %p31 = por %p29, %p30
      %p32 = scmp.ne.s32.totalorder %s24, %s27
      %p33 = scmp.eq.s32.totalorder %s14, 0
      %p34 = por %p32, %p33
      %p35 = scmp.ne.s32.totalorder %s24, %s27
      %p36 = scmp.eq.s32.totalorder %s19, 1
      %p37 = por %p35, %p36
      %p38 = scmp.ne.s32.totalorder %s27, %s28
      %p39 = scmp.eq.s32.totalorder %s19, 0
      %p40 = por %p38, %p39
      %p41 = scmp.ne.s32.totalorder %s27, %s28
      %p42 = scmp.eq.s32.totalorder %s20, 1
      %p43 = por %p41, %p42
      %p45 = scmp.ne.s32.totalorder %s28, %s44
      %p46 = scmp.eq.s32.totalorder %s20, 0
      %p47 = por %p45, %p46
      %s49 = sadd.s32 %s48, 1
      %p52 = scmp.eq.s32.totalorder %s14, 1
      %p53 = scmp.ne.s32.totalorder %s48, %s50
      %p54 = scmp.eq.s32.totalorder %s14, 0
      %p55 = por %p53, %p54
      %p56 = scmp.ne.s32.totalorder %s48, %s50
      %p57 = scmp.eq.s32.totalorder %s19, 1
      %p58 = por %p56, %p57
      %p59 = scmp.ne.s32.totalorder %s50, %s51
      %p60 = scmp.eq.s32.totalorder %s19, 0
      %p61 = por %p59, %p60
      %p62 = scmp.ne.s32.totalorder %s50, %s51
      %p63 = scmp.eq.s32.totalorder %s20, 1
      %p64 = por %p62, %p63
      %p66 = scmp.ne.s32.totalorder %s51, %s65
      %p67 = scmp.eq.s32.totalorder %s20, 0
      %p68 = por %p66, %p67
      %s70 = sadd.s32 %s69, 1
      %p73 = scmp.eq.s32.totalorder %s14, 1
      %p74 = scmp.ne.s32.totalorder %s69, %s71
      %p75 = scmp.eq.s32.totalorder %s14, 0
      %p76 = por %p74, %p75
      %p77 = scmp.ne.s32.totalorder %s69, %s71
      %p78 = scmp.eq.s32.totalorder %s19, 1
      %p79 = por %p77, %p78
      %p80 = scmp.ne.s32.totalorder %s71, %s72
      %p81 = scmp.eq.s32.totalorder %s19, 0
      %p82 = por %p80, %p81
      %p83 = scmp.ne.s32.totalorder %s71, %s72
      %p84 = scmp.eq.s32.totalorder %s20, 1
      %p85 = por %p83, %p84
      %p87 = scmp.ne.s32.totalorder %s72, %s86
      %p88 = scmp.eq.s32.totalorder %s20, 0
      %p89 = por %p87, %p88
      %s91 = sadd.s32 %s90, 1
      %p94 = scmp.eq.s32.totalorder %s14, 1
      %p95 = scmp.ne.s32.totalorder %s90, %s92
      %p96 = scmp.eq.s32.totalorder %s14, 0
      %p97 = por %p95, %p96
      %p98 = scmp.ne.s32.totalorder %s90, %s92
      %p99 = scmp.eq.s32.totalorder %s19, 1
      %p100 = por %p98, %p99
      %p101 = scmp.ne.s32.totalorder %s92, %s93
      %p102 = scmp.eq.s32.totalorder %s19, 0
      %p103 = por %p101, %p102
      %p104 = scmp.ne.s32.totalorder %s92, %s93
      %p105 = scmp.eq.s32.totalorder %s20, 1
      %p106 = por %p104, %p105
      %p108 = scmp.ne.s32.totalorder %s93, %s107
      %p109 = scmp.eq.s32.totalorder %s20, 0
      %p110 = por %p108, %p109
      %s112 = sadd.s32 %s111, 1
      %p115 = scmp.eq.s32.totalorder %s14, 1
      %p116 = scmp.ne.s32.totalorder %s111, %s113
      %p117 = scmp.eq.s32.totalorder %s14, 0
      %p118 = por %p116, %p117
      %p119 = scmp.ne.s32.totalorder %s111, %s113
      %p120 = scmp.eq.s32.totalorder %s19, 1
      %p121 = por %p119, %p120
      %p122 = scmp.ne.s32.totalorder %s113, %s114
      %p123 = scmp.eq.s32.totalorder %s19, 0
      %p124 = por %p122, %p123
      %p125 = scmp.ne.s32.totalorder %s113, %s114
      %p126 = scmp.eq.s32.totalorder %s20, 1
      %p127 = por %p125, %p126
      %p129 = scmp.ne.s32.totalorder %s114, %s128
      %p130 = scmp.eq.s32.totalorder %s20, 0
      %p131 = por %p129, %p130
      %s132 = ssub.s32 %s14, %s21
      %p133 = scmp.eq.s32.totalorder %s132, 0
      %s135 = sadd.s32 %s134, 1
      %s136 = scalar_select %p133, %s134, %s135
      %p139 = pneg %p133
      %p140 = scmp.eq.s32.totalorder %s14, 1
      %p141 = por %p139, %p140
      %p142 = scmp.ne.s32.totalorder %s134, %s137
      %p143 = scmp.eq.s32.totalorder %s14, 0
      %p144 = por %p142, %p143
      %p145 = scmp.ne.s32.totalorder %s134, %s137
      %p146 = scmp.eq.s32.totalorder %s19, 1
      %p147 = por %p145, %p146
      %p148 = scmp.ne.s32.totalorder %s137, %s138
      %p149 = scmp.eq.s32.totalorder %s19, 0
      %p150 = por %p148, %p149
      %p151 = scmp.ne.s32.totalorder %s137, %s138
      %p152 = scmp.eq.s32.totalorder %s20, 1
      %p153 = por %p151, %p152
      %p155 = scmp.ne.s32.totalorder %s138, %s154
      %p156 = scmp.eq.s32.totalorder %s20, 0
      %p157 = por %p155, %p156
      %p158 = scmp.le.s32.totalorder 1, %s14
      %p159 = scmp.lt.s32.totalorder %s14, 3
      %p160 = pnand %p158, %p159
      %p161 = pneg %p160
      // Predicated region
      $region9: #{tpu_custom_call.1} parent=5 // pred_check
        _
      $region10: #{tpu_custom_call.1} parent=5 // pred_check_branch
        %163 = sbr.rel (%p160) target = $region12
      $region11: #{tpu_custom_call.1} parent=5 // pred_region
        %s164 = ssub.s32 %s14, 1
        // Predicated region
        $region13: #{tpu_custom_call.1} parent=11 // pred_check
          %p165 = pneg %p61
        $region14: #{tpu_custom_call.1} parent=11 // pred_check_branch
          %167 = sbr.rel (%p165) target = $region16
        $region15: #{tpu_custom_call.1} parent=11 // pred_region
          _
        $region16: #{tpu_custom_call.1} parent=11 // pred_fallthru
          _
        // Predicated region
        $region17: #{tpu_custom_call.1} parent=11 // pred_check
          %p168 = pneg %p82
        $region18: #{tpu_custom_call.1} parent=11 // pred_check_branch
          %170 = sbr.rel (%p168) target = $region20
        $region19: #{tpu_custom_call.1} parent=11 // pred_region
          _
        $region20: #{tpu_custom_call.1} parent=11 // pred_fallthru
          _
        // Predicated region
        $region21: #{tpu_custom_call.1} parent=11 // pred_check
          %p171 = pneg %p103
        $region22: #{tpu_custom_call.1} parent=11 // pred_check_branch
          %173 = sbr.rel (%p171) target = $region24
        $region23: #{tpu_custom_call.1} parent=11 // pred_region
          _
        $region24: #{tpu_custom_call.1} parent=11 // pred_fallthru
          _
        // Predicated region
        $region25: #{tpu_custom_call.1} parent=11 // pred_check
          %p174 = pneg %p124
        $region26: #{tpu_custom_call.1} parent=11 // pred_check_branch
          %176 = sbr.rel (%p174) target = $region28
        $region27: #{tpu_custom_call.1} parent=11 // pred_region
          _
        $region28: #{tpu_custom_call.1} parent=11 // pred_fallthru
          _
      $region12: #{tpu_custom_call.1} parent=5 // pred_fallthru
        _
      %p177 = scmp.lt.s32.totalorder %s14, 2
      // Predicated region
      $region29: #{tpu_custom_call.1} parent=5 // pred_check
        %p178 = pneg %p177
      $region30: #{tpu_custom_call.1} parent=5 // pred_check_branch
        %180 = sbr.rel (%p178) target = $region32
      $region31: #{tpu_custom_call.1} parent=5 // pred_region
        // Predicated region
        $region33: #{tpu_custom_call.1} parent=31 // pred_check
          %p181 = pneg %p34
        $region34: #{tpu_custom_call.1} parent=31 // pred_check_branch
          %183 = sbr.rel (%p181) target = $region36
        $region35: #{tpu_custom_call.1} parent=31 // pred_region
          %p184 = scmp.lt.s32.totalorder %s14, 1
          %s185 = scalar_select %p184, %s14, 1
          %s186 = smul.addr %s185, 8
          %s187 = scalar_lea.vmem %s0, %s186
        $region36: #{tpu_custom_call.1} parent=31 // pred_fallthru
          _
      $region32: #{tpu_custom_call.1} parent=5 // pred_fallthru
        _
      %p188 = scmp.le.s32.totalorder 1, %s14
      %p189 = scmp.lt.s32.totalorder %s14, 3
      %p190 = pnand %p188, %p189
      %p191 = pneg %p190
      // Predicated region
      $region37: #{tpu_custom_call.1} parent=5 // pred_check
        _
      $region38: #{tpu_custom_call.1} parent=5 // pred_check_branch
        %193 = sbr.rel (%p190) target = $region40
      $region39: #{tpu_custom_call.1} parent=5 // pred_region
        %s194 = ssub.s32 %s14, 1
        %p195 = scmp.lt.s32.totalorder %s19, 1
        %s196 = scalar_select %p195, %s19, 1
        %s197 = smul.addr %s196, 8
        %s198 = scalar_lea.vmem %s0, %s197
        %p199 = pneg %p40
        %p200 = pneg %p37
        %p201 = pneg %p61
        %p202 = pneg %p58
        %p203 = pneg %p82
        %p204 = pneg %p79
        %p205 = pneg %p103
        %p206 = pneg %p100
        %p207 = pneg %p124
        %p208 = pneg %p121
        %p209 = pneg %p150
        %p210 = pneg %p147
        %s211 = sand.u32 %s137, 1
        %s212 = scalar_lea.sflag [#allocation3], %s211
        %s213 = sand.u32 %s137, 1
        %s214 = smul.addr %s213, 8
        %s215 = scalar_lea.vmem [#allocation2], %s214
        %p216 = scmp.lt.s32.totalorder %s19, 1
        %s217 = scalar_select %p216, %s19, 1
        %s218 = smul.addr %s217, 8
        %s219 = scalar_lea.vmem %s0, %s218
        %v220 = vld [vmem:[%s219] sm:$0xff]
        %v221 = vld [vmem:[%s1] sm:$0xff]
        %v222 = vld [vmem:[%s1 + $0x8] sm:$0xff]
        %v223 = vld [vmem:[%s1 + $0x10] sm:$0xff]
        %v224 = vld [vmem:[%s1 + $0x18] sm:$0xff]
        %v225 = vld [vmem:[%s2] sm:$0x1]
        %v227 = vlaneseq
        %v228 = vshrl.u32 %v227, 7
        %v229 = vsub.s32 0, %v228
        %v230 = vrot.slane %v225, %v229
        %vm232 = vcmask 261120
        %v234 = vsel %vm232, %v220, 0
        %236 = vmatprep.subr.mxu0 0.0
        %237 = vmatpush1.msra.mxu0 %v221
        %238 = vmatprep.subr.mxu0 0.0
        %239 = vmatpush1.msra.mxu0 %v222
        %240 = vmatprep.subr.mxu0 0.0
        %241 = vmatpush1.msra.mxu0 %v223
        %242 = vmatprep.subr.mxu0 0.0
        %243 = vmatpush1.msra.mxu0 %v224
        %244 = vmatprep.subr.mxu0 0.0
        %245 = vmatpush1.msra.mxu0 0.0
        %246 = vmatprep.subr.mxu0 0.0
        %247 = vmatpush1.msra.mxu0 0.0
        %248 = vmatprep.subr.mxu0 0.0
        %249 = vmatpush1.msra.mxu0 0.0
        %250 = vmatprep.subr.mxu0 0.0
        %251 = vmatpush1.msra.mxu0 0.0
        %252 = vmatprep.subr.mxu0 0.0
        %253 = vmatpush1.msra.mxu0 0.0
        %254 = vmatprep.subr.mxu0 0.0
        %255 = vmatpush1.msra.mxu0 0.0
        %256 = vmatprep.subr.mxu0 0.0
        %257 = vmatpush1.msra.mxu0 0.0
        %258 = vmatprep.subr.mxu0 0.0
        %259 = vmatpush1.msra.mxu0 0.0
        %260 = vmatprep.subr.mxu0 0.0
        %261 = vmatpush1.msra.mxu0 0.0
        %262 = vmatprep.subr.mxu0 0.0
        %263 = vmatpush1.msra.mxu0 0.0
        %264 = vmatprep.subr.mxu0 0.0
        %265 = vmatpush1.msra.mxu0 0.0
        %266 = vmatprep.subr.mxu0 0.0
        %267 = vmatpush1.msra.mxu0 0.0
        %268 = vmatprep.subr.mxu0 0.0
        %269 = vmatpush1.msra.mxu0 0.0
        %270 = vmatprep.subr.mxu0 0.0
        %271 = vmatpush1.msra.mxu0 0.0
        %272 = vmatprep.subr.mxu0 0.0
        %273 = vmatpush1.msra.mxu0 0.0
        %274 = vmatprep.subr.mxu0 0.0
        %275 = vmatpush1.msra.mxu0 0.0
        %276 = vmatprep.subr.mxu0 0.0
        %277 = vmatpush1.msra.mxu0 0.0
        %278 = vmatprep.subr.mxu0 0.0
        %279 = vmatpush1.msra.mxu0 0.0
        %280 = vmatprep.subr.mxu0 0.0
        %281 = vmatpush1.msra.mxu0 0.0
        %282 = vmatprep.subr.mxu0 0.0
        %283 = vmatpush1.msra.mxu0 0.0
        %284 = vmatprep.subr.mxu0 0.0
        %285 = vmatpush1.msra.mxu0 0.0
        %286 = vmatprep.subr.mxu0 0.0
        %287 = vmatpush1.msra.mxu0 0.0
        %288 = vmatprep.subr.mxu0 0.0
        %289 = vmatpush1.msra.mxu0 0.0
        %290 = vmatprep.subr.mxu0 0.0
        %291 = vmatpush1.msra.mxu0 0.0
        %292 = vmatprep.subr.mxu0 0.0
        %293 = vmatpush1.msra.mxu0 0.0
        %294 = vmatprep.subr.mxu0 0.0
        %295 = vmatpush1.msra.mxu0 0.0
        %296 = vmatprep.subr.mxu0 0.0
        %297 = vmatpush1.msra.mxu0 0.0
        %298 = vmatprep.subr.mxu0 0.0
        %299 = vmatpush1.msra.mxu0 0.0
        %300 = vmatprep.mubr.f32.mxu0 0.0
        %301 = vmatmul.mubr.f32.gmra.mrb[0].mxu0 %v234
        %v302 = vpop.f32.mrb[0].mxu0
        %v303 = vadd.f32 %v230, %v302
        %v304 = vpop.f32.mrb[0].mxu0
        %305 = vdwg.mxu0
        %v306 = vmul.f32 %v303, 0.5
        %v307 = vmul.f32 %v303, %v303
        %v308 = vmul.f32 %v307, %v303
        %v309 = vmul.f32 %v308, 0.044715
        %v310 = vadd.f32 %v303, %v309
        %v311 = vmul.f32 %v310, 0.7978846
        %v312 = vtanh.pop %v311
        %v313 = vadd.f32 %v312, 1.0
        %v314 = vmul.f32 %v306, %v313
        %v315 = vld [vmem:[%s3] sm:$0xff]
        %v316 = vld [vmem:[%s3 + $0x8] sm:$0xff]
        %v317 = vld [vmem:[%s3 + $0x10] sm:$0xff]
        %v318 = vld [vmem:[%s3 + $0x18] sm:$0xff]
        %v319 = vld [vmem:[%s3 + $0x20] sm:$0xff]
        %v320 = vld [vmem:[%s3 + $0x28] sm:$0xff]
        %v321 = vld [vmem:[%s3 + $0x30] sm:$0xff]
        %v322 = vld [vmem:[%s3 + $0x38] sm:$0xff]
        %v323 = vld [vmem:[%s3 + $0x40] sm:$0xff]
        %v324 = vld [vmem:[%s3 + $0x48] sm:$0xff]
        %v325 = vld [vmem:[%s3 + $0x50] sm:$0xff]
        %v326 = vld [vmem:[%s3 + $0x58] sm:$0xff]
        %v327 = vld [vmem:[%s3 + $0x60] sm:$0xff]
        %v328 = vld [vmem:[%s3 + $0x68] sm:$0xff]
        %v329 = vld [vmem:[%s3 + $0x70] sm:$0xff]
        %v330 = vld [vmem:[%s3 + $0x78] sm:$0xff]
        %v331 = vld [vmem:[%s4] sm:$0x1]
        %v333 = vlaneseq
        %v334 = vshrl.u32 %v333, 7
        %v335 = vsub.s32 0, %v334
        %v336 = vrot.slane %v331, %v335
        %338 = vmatprep.subr.mxu0 0.0
        %339 = vmatpush1.msra.mxu0 %v315
        %340 = vmatprep.subr.mxu0 0.0
        %341 = vmatpush1.msra.mxu0 %v316
        %342 = vmatprep.subr.mxu0 0.0
        %343 = vmatpush1.msra.mxu0 %v317
        %344 = vmatprep.subr.mxu0 0.0
        %345 = vmatpush1.msra.mxu0 %v318
        %346 = vmatprep.subr.mxu0 0.0
        %347 = vmatpush1.msra.mxu0 %v319
        %348 = vmatprep.subr.mxu0 0.0
        %349 = vmatpush1.msra.mxu0 %v320
        %350 = vmatprep.subr.mxu0 0.0
        %351 = vmatpush1.msra.mxu0 %v321
        %352 = vmatprep.subr.mxu0 0.0
        %353 = vmatpush1.msra.mxu0 %v322
        %354 = vmatprep.subr.mxu0 0.0
        %355 = vmatpush1.msra.mxu0 %v323
        %356 = vmatprep.subr.mxu0 0.0
        %357 = vmatpush1.msra.mxu0 %v324
        %358 = vmatprep.subr.mxu0 0.0
        %359 = vmatpush1.msra.mxu0 %v325
        %360 = vmatprep.subr.mxu0 0.0
        %361 = vmatpush1.msra.mxu0 %v326
        %362 = vmatprep.subr.mxu0 0.0
        %363 = vmatpush1.msra.mxu0 %v327
        %364 = vmatprep.subr.mxu0 0.0
        %365 = vmatpush1.msra.mxu0 %v328
        %366 = vmatprep.subr.mxu0 0.0
        %367 = vmatpush1.msra.mxu0 %v329
        %368 = vmatprep.subr.mxu0 0.0
        %369 = vmatpush1.msra.mxu0 %v330
        %370 = vmatprep.subr.mxu0 0.0
        %371 = vmatpush1.msra.mxu0 0.0
        %372 = vmatprep.subr.mxu0 0.0
        %373 = vmatpush1.msra.mxu0 0.0
        %374 = vmatprep.subr.mxu0 0.0
        %375 = vmatpush1.msra.mxu0 0.0
        %376 = vmatprep.subr.mxu0 0.0
        %377 = vmatpush1.msra.mxu0 0.0
        %378 = vmatprep.subr.mxu0 0.0
        %379 = vmatpush1.msra.mxu0 0.0
        %380 = vmatprep.subr.mxu0 0.0
        %381 = vmatpush1.msra.mxu0 0.0
        %382 = vmatprep.subr.mxu0 0.0
        %383 = vmatpush1.msra.mxu0 0.0
        %384 = vmatprep.subr.mxu0 0.0
        %385 = vmatpush1.msra.mxu0 0.0
        %386 = vmatprep.subr.mxu0 0.0
        %387 = vmatpush1.msra.mxu0 0.0
        %388 = vmatprep.subr.mxu0 0.0
        %389 = vmatpush1.msra.mxu0 0.0
        %390 = vmatprep.subr.mxu0 0.0
        %391 = vmatpush1.msra.mxu0 0.0
        %392 = vmatprep.subr.mxu0 0.0
        %393 = vmatpush1.msra.mxu0 0.0
        %394 = vmatprep.subr.mxu0 0.0
        %395 = vmatpush1.msra.mxu0 0.0
        %396 = vmatprep.subr.mxu0 0.0
        %397 = vmatpush1.msra.mxu0 0.0
        %398 = vmatprep.subr.mxu0 0.0
        %399 = vmatpush1.msra.mxu0 0.0
        %400 = vmatprep.subr.mxu0 0.0
        %401 = vmatpush1.msra.mxu0 0.0
        %402 = vmatprep.mubr.f32.mxu0 0.0
        %403 = vmatmul.mubr.f32.gmra.mrb[0].mxu0 %v314
        %v404 = vpop.f32.mrb[0].mxu0
        %v405 = vadd.f32 %v336, %v404
        %v406 = vpop.f32.mrb[0].mxu0
        %407 = vdwg.mxu0
        %408 = vst.msk [vmem:[%s215] sm:$0xff] %vm232, %v405
        %s409 = sand.u32 %s137, 1
        %s410 = scalar_lea.sflag [#allocation3], %s409
        %s411 = sand.u32 %s137, 1
        %s412 = smul.addr %s411, 8
        %s413 = scalar_lea.vmem [#allocation2], %s412
        // Predicated region
        $region41: #{tpu_custom_call.1} parent=39 // pred_check
          %p414 = pneg %p147
        $region42: #{tpu_custom_call.1} parent=39 // pred_check_branch
          %416 = sbr.rel (%p414) target = $region44
        $region43: #{tpu_custom_call.1} parent=39 // pred_region
          %s418 = ssub.s32 128, 128
          %419 = vsyncadd %s410, %s418
          %s420 = smul.addr %s19, 128
          %s421 = scalar_lea.hbm %s5, %s420
          %s423 = sshll.u32 %s413, 4
          %s424 = int_to_ptr.vmem [resolvable:$true] %s423
          %426 = dma.vmem_to_hbm [thread:$0]  %s424, 128, %s421, %s410
        $region44: #{tpu_custom_call.1} parent=39 // pred_fallthru
          _
      $region40: #{tpu_custom_call.1} parent=5 // pred_fallthru
        _
      %p427 = scmp.le.s32.totalorder 2, %s14
      // Predicated region
      $region45: #{tpu_custom_call.1} parent=5 // pred_check
        %p428 = pneg %p427
      $region46: #{tpu_custom_call.1} parent=5 // pred_check_branch
        %430 = sbr.rel (%p428) target = $region48
      $region47: #{tpu_custom_call.1} parent=5 // pred_region
        %s431 = ssub.s32 %s14, 2
        // Predicated region
        $region49: #{tpu_custom_call.1} parent=47 // pred_check
          %p432 = pneg %p153
        $region50: #{tpu_custom_call.1} parent=47 // pred_check_branch
          %434 = sbr.rel (%p432) target = $region52
        $region51: #{tpu_custom_call.1} parent=47 // pred_region
          %s435 = sand.u32 %s138, 1
          %s436 = scalar_lea.sflag [#allocation3], %s435
          %s437 = sand.u32 %s138, 1
          %s438 = smul.addr %s437, 8
          %s439 = scalar_lea.vmem [#allocation2], %s438
          %440 = dma.done %s436, 128
        $region52: #{tpu_custom_call.1} parent=47 // pred_fallthru
          _
      $region48: #{tpu_custom_call.1} parent=5 // pred_fallthru
        _
    $region6: #{tpu_custom_call.1} parent=1 // loop_footer
      %s18 = sadd.s32 1, %s14
    $region7: #{tpu_custom_call.1} parent=1 // loop_footer_branch
      %13 = sbr.rel target = $region3
    $region8: #{tpu_custom_call.1} parent=1 // loop_exit
      _
    %441 = vsyncpa [#allocation3], 1
    %s442 = scalar_lea.sflag [#allocation3], 1
    %443 = vsyncpa %s442, 1

// kernel: tpu_custom_call.1
$region0: #{tpu_custom_call.1}
  #allocation0 [shape = 'u32[]', space=smem, size = 0x4, offset = 0x4, fixed_abs, tag = 'smem constant byte address 0x4 - core index']
  #allocation1 [shape = 'u32[144,128]{1,0:T(1,128)}', space=vmem, size = 0x12000, scoped, tag = 'internal scratch']
  %s0 = inlined_call_operand.vmem [shape: f32[16,32], index: 0, kind: input, shape index: {}]
  %s1 = inlined_call_operand.vmem [shape: f32[32,128], index: 1, kind: input, shape index: {}]
  %s2 = inlined_call_operand.vmem [shape: f32[1,128], index: 2, kind: input, shape index: {}]
  %s3 = inlined_call_operand.vmem [shape: f32[128,32], index: 3, kind: input, shape index: {}]
  %s4 = inlined_call_operand.vmem [shape: f32[1,32], index: 4, kind: input, shape index: {}]
  %s5 = inlined_call_operand.hbm [shape: f32[16,32], index: 5, kind: output, shape index: {}]
  %s6 = sld [smem:[#allocation0]]
  $region53: #{tpu_custom_call.1} parent=0
    _
  %s8 = ssub.s32 1, %s6
  %s9 = scalar_select 0, %s8, %s6
  $region1: #{tpu_custom_call.1} parent=0
    #allocation2 [shape = 'u8[8192]{0}', space=vmem, size = 0x2000, scoped, tag = 'output window, operand 0']
    #allocation3 [shape = 's32[2]{0}', space=sflag, size = 0x8, scoped, tag = 'scoped memory for tpu_custom_call.1']
    %10 = vsyncpa [#allocation3], 0
    %s11 = scalar_lea.sflag [#allocation3], 1
    %12 = vsyncpa %s11, 0
    loop: start=0, step=1, limit=4
    $region2: #{tpu_custom_call.1} parent=1 // loop_pre_header
      _
    $region3: #{tpu_custom_call.1} parent=1 // loop_header
      %s14 = sphi 0, %s18
      %p15 = scmp.ge.s32.totalorder %s14, 4
      %s24 = sphi 0, %s26
      %s27 = sphi 0, %s24
      %s28 = sphi 0, %s27
      %s44 = sphi 0, %s28
      %s48 = sphi 0, %s48
      %s50 = sphi 0, %s48
      %s51 = sphi 0, %s50
      %s65 = sphi 0, %s51
      %s69 = sphi 0, %s69
      %s71 = sphi 0, %s69
      %s72 = sphi 0, %s71
      %s86 = sphi 0, %s72
      %s90 = sphi 0, %s90
      %s92 = sphi 0, %s90
      %s93 = sphi 0, %s92
      %s107 = sphi 0, %s93
      %s111 = sphi 0, %s111
      %s113 = sphi 0, %s111
      %s114 = sphi 0, %s113
      %s128 = sphi 0, %s114
      %s134 = sphi 0, %s136
      %s137 = sphi 0, %s134
      %s138 = sphi 0, %s137
      %s154 = sphi 0, %s138
    $region4: #{tpu_custom_call.1} parent=1 // loop_header_branch
      %17 = sbr.rel (%p15) target = $region8
    $region5: #{tpu_custom_call.1} parent=1 // loop_body
      %s19 = ssub.s32 %s14, 1
      %s20 = ssub.s32 %s14, 2
      %s21 = sadd.s32 %s14, 1
      %s22 = ssub.s32 %s14, %s21
      %p23 = scmp.eq.s32.totalorder %s22, 0
      %s25 = sadd.s32 %s24, 1
      %s26 = scalar_select %p23, %s24, %s25
      %p29 = pneg %p23
      %p30 = scmp.eq.s32.totalorder %s14, 1
      %p31 = por %p29, %p30
      %p32 = scmp.ne.s32.totalorder %s24, %s27
      %p33 = scmp.eq.s32.totalorder %s14, 0
      %p34 = por %p32, %p33
      %p35 = scmp.ne.s32.totalorder %s24, %s27
      %p36 = scmp.eq.s32.totalorder %s19, 1
      %p37 = por %p35, %p36
      %p38 = scmp.ne.s32.totalorder %s27, %s28
      %p39 = scmp.eq.s32.totalorder %s19, 0
      %p40 = por %p38, %p39
      %p41 = scmp.ne.s32.totalorder %s27, %s28
      %p42 = scmp.eq.s32.totalorder %s20, 1
      %p43 = por %p41, %p42
      %p45 = scmp.ne.s32.totalorder %s28, %s44
      %p46 = scmp.eq.s32.totalorder %s20, 0
      %p47 = por %p45, %p46
      %s49 = sadd.s32 %s48, 1
      %p52 = scmp.eq.s32.totalorder %s14, 1
      %p53 = scmp.ne.s32.totalorder %s48, %s50
      %p54 = scmp.eq.s32.totalorder %s14, 0
      %p55 = por %p53, %p54
      %p56 = scmp.ne.s32.totalorder %s48, %s50
      %p57 = scmp.eq.s32.totalorder %s19, 1
      %p58 = por %p56, %p57
      %p59 = scmp.ne.s32.totalorder %s50, %s51
      %p60 = scmp.eq.s32.totalorder %s19, 0
      %p61 = por %p59, %p60
      %p62 = scmp.ne.s32.totalorder %s50, %s51
      %p63 = scmp.eq.s32.totalorder %s20, 1
      %p64 = por %p62, %p63
      %p66 = scmp.ne.s32.totalorder %s51, %s65
      %p67 = scmp.eq.s32.totalorder %s20, 0
      %p68 = por %p66, %p67
      %s70 = sadd.s32 %s69, 1
      %p73 = scmp.eq.s32.totalorder %s14, 1
      %p74 = scmp.ne.s32.totalorder %s69, %s71
      %p75 = scmp.eq.s32.totalorder %s14, 0
      %p76 = por %p74, %p75
      %p77 = scmp.ne.s32.totalorder %s69, %s71
      %p78 = scmp.eq.s32.totalorder %s19, 1
      %p79 = por %p77, %p78
      %p80 = scmp.ne.s32.totalorder %s71, %s72
      %p81 = scmp.eq.s32.totalorder %s19, 0
      %p82 = por %p80, %p81
      %p83 = scmp.ne.s32.totalorder %s71, %s72
      %p84 = scmp.eq.s32.totalorder %s20, 1
      %p85 = por %p83, %p84
      %p87 = scmp.ne.s32.totalorder %s72, %s86
      %p88 = scmp.eq.s32.totalorder %s20, 0
      %p89 = por %p87, %p88
      %s91 = sadd.s32 %s90, 1
      %p94 = scmp.eq.s32.totalorder %s14, 1
      %p95 = scmp.ne.s32.totalorder %s90, %s92
      %p96 = scmp.eq.s32.totalorder %s14, 0
      %p97 = por %p95, %p96
      %p98 = scmp.ne.s32.totalorder %s90, %s92
      %p99 = scmp.eq.s32.totalorder %s19, 1
      %p100 = por %p98, %p99
      %p101 = scmp.ne.s32.totalorder %s92, %s93
      %p102 = scmp.eq.s32.totalorder %s19, 0
      %p103 = por %p101, %p102
      %p104 = scmp.ne.s32.totalorder %s92, %s93
      %p105 = scmp.eq.s32.totalorder %s20, 1
      %p106 = por %p104, %p105
      %p108 = scmp.ne.s32.totalorder %s93, %s107
      %p109 = scmp.eq.s32.totalorder %s20, 0
      %p110 = por %p108, %p109
      %s112 = sadd.s32 %s111, 1
      %p115 = scmp.eq.s32.totalorder %s14, 1
      %p116 = scmp.ne.s32.totalorder %s111, %s113
      %p117 = scmp.eq.s32.totalorder %s14, 0
      %p118 = por %p116, %p117
      %p119 = scmp.ne.s32.totalorder %s111, %s113
      %p120 = scmp.eq.s32.totalorder %s19, 1
      %p121 = por %p119, %p120
      %p122 = scmp.ne.s32.totalorder %s113, %s114
      %p123 = scmp.eq.s32.totalorder %s19, 0
      %p124 = por %p122, %p123
      %p125 = scmp.ne.s32.totalorder %s113, %s114
      %p126 = scmp.eq.s32.totalorder %s20, 1
      %p127 = por %p125, %p126
      %p129 = scmp.ne.s32.totalorder %s114, %s128
      %p130 = scmp.eq.s32.totalorder %s20, 0
      %p131 = por %p129, %p130
      %s132 = ssub.s32 %s14, %s21
      %p133 = scmp.eq.s32.totalorder %s132, 0
      %s135 = sadd.s32 %s134, 1
      %s136 = scalar_select %p133, %s134, %s135
      %p139 = pneg %p133
      %p140 = scmp.eq.s32.totalorder %s14, 1
      %p141 = por %p139, %p140
      %p142 = scmp.ne.s32.totalorder %s134, %s137
      %p143 = scmp.eq.s32.totalorder %s14, 0
      %p144 = por %p142, %p143
      %p145 = scmp.ne.s32.totalorder %s134, %s137
      %p146 = scmp.eq.s32.totalorder %s19, 1
      %p147 = por %p145, %p146
      %p148 = scmp.ne.s32.totalorder %s137, %s138
      %p149 = scmp.eq.s32.totalorder %s19, 0
      %p150 = por %p148, %p149
      %p151 = scmp.ne.s32.totalorder %s137, %s138
      %p152 = scmp.eq.s32.totalorder %s20, 1
      %p153 = por %p151, %p152
      %p155 = scmp.ne.s32.totalorder %s138, %s154
      %p156 = scmp.eq.s32.totalorder %s20, 0
      %p157 = por %p155, %p156
      %p158 = scmp.le.s32.totalorder 1, %s14
      %p159 = scmp.lt.s32.totalorder %s14, 3
      %p160 = pnand %p158, %p159
      %p161 = pneg %p160
      // Predicated region
      $region9: #{tpu_custom_call.1} parent=5 // pred_check
        _
      $region10: #{tpu_custom_call.1} parent=5 // pred_check_branch
        %163 = sbr.rel (%p160) target = $region12
      $region11: #{tpu_custom_call.1} parent=5 // pred_region
        %s164 = ssub.s32 %s14, 1
        // Predicated region
        $region13: #{tpu_custom_call.1} parent=11 // pred_check
          %p165 = pneg %p61
        $region14: #{tpu_custom_call.1} parent=11 // pred_check_branch
          %167 = sbr.rel (%p165) target = $region16
        $region15: #{tpu_custom_call.1} parent=11 // pred_region
          _
        $region16: #{tpu_custom_call.1} parent=11 // pred_fallthru
          _
        // Predicated region
        $region17: #{tpu_custom_call.1} parent=11 // pred_check
          %p168 = pneg %p82
        $region18: #{tpu_custom_call.1} parent=11 // pred_check_branch
          %170 = sbr.rel (%p168) target = $region20
        $region19: #{tpu_custom_call.1} parent=11 // pred_region
          _
        $region20: #{tpu_custom_call.1} parent=11 // pred_fallthru
          _
        // Predicated region
        $region21: #{tpu_custom_call.1} parent=11 // pred_check
          %p171 = pneg %p103
        $region22: #{tpu_custom_call.1} parent=11 // pred_check_branch
          %173 = sbr.rel (%p171) target = $region24
        $region23: #{tpu_custom_call.1} parent=11 // pred_region
          _
        $region24: #{tpu_custom_call.1} parent=11 // pred_fallthru
          _
        // Predicated region
        $region25: #{tpu_custom_call.1} parent=11 // pred_check
          %p174 = pneg %p124
        $region26: #{tpu_custom_call.1} parent=11 // pred_check_branch
          %176 = sbr.rel (%p174) target = $region28
        $region27: #{tpu_custom_call.1} parent=11 // pred_region
          _
        $region28: #{tpu_custom_call.1} parent=11 // pred_fallthru
          _
      $region12: #{tpu_custom_call.1} parent=5 // pred_fallthru
        _
      %p177 = scmp.lt.s32.totalorder %s14, 2
      // Predicated region
      $region29: #{tpu_custom_call.1} parent=5 // pred_check
        %p178 = pneg %p177
      $region30: #{tpu_custom_call.1} parent=5 // pred_check_branch
        %180 = sbr.rel (%p178) target = $region32
      $region31: #{tpu_custom_call.1} parent=5 // pred_region
        // Predicated region
        $region33: #{tpu_custom_call.1} parent=31 // pred_check
          %p181 = pneg %p34
        $region34: #{tpu_custom_call.1} parent=31 // pred_check_branch
          %183 = sbr.rel (%p181) target = $region36
        $region35: #{tpu_custom_call.1} parent=31 // pred_region
          %p184 = scmp.lt.s32.totalorder %s14, 1
          %s185 = scalar_select %p184, %s14, 1
          %s186 = smul.addr %s185, 8
          %s187 = scalar_lea.vmem %s0, %s186
        $region36: #{tpu_custom_call.1} parent=31 // pred_fallthru
          _
      $region32: #{tpu_custom_call.1} parent=5 // pred_fallthru
        _
      %p188 = scmp.le.s32.totalorder 1, %s14
      %p189 = scmp.lt.s32.totalorder %s14, 3
      %p190 = pnand %p188, %p189
      %p191 = pneg %p190
      // Predicated region
      $region37: #{tpu_custom_call.1} parent=5 // pred_check
        _
      $region38: #{tpu_custom_call.1} parent=5 // pred_check_branch
        %193 = sbr.rel (%p190) target = $region40
      $region39: #{tpu_custom_call.1} parent=5 // pred_region
        %s194 = ssub.s32 %s14, 1
        %p195 = scmp.lt.s32.totalorder %s19, 1
        %s196 = scalar_select %p195, %s19, 1
        %s197 = smul.addr %s196, 8
        %s198 = scalar_lea.vmem %s0, %s197
        %p199 = pneg %p40
        %p200 = pneg %p37
        %p201 = pneg %p61
        %p202 = pneg %p58
        %p203 = pneg %p82
        %p204 = pneg %p79
        %p205 = pneg %p103
        %p206 = pneg %p100
        %p207 = pneg %p124
        %p208 = pneg %p121
        %p209 = pneg %p150
        %p210 = pneg %p147
        %s211 = sand.u32 %s137, 1
        %s212 = scalar_lea.sflag [#allocation3], %s211
        %s213 = sand.u32 %s137, 1
        %s214 = smul.addr %s213, 8
        %s215 = scalar_lea.vmem [#allocation2], %s214
        %p216 = scmp.lt.s32.totalorder %s19, 1
        %s217 = scalar_select %p216, %s19, 1
        %s218 = smul.addr %s217, 8
        %s219 = scalar_lea.vmem %s0, %s218
        %v220 = vld [vmem:[%s219] sm:$0xff]
        %v221 = vld [vmem:[%s1] sm:$0xff]
        %v222 = vld [vmem:[%s1 + $0x8] sm:$0xff]
        %v223 = vld [vmem:[%s1 + $0x10] sm:$0xff]
        %v224 = vld [vmem:[%s1 + $0x18] sm:$0xff]
        %v225 = vld [vmem:[%s2] sm:$0x1]
        %v227 = vlaneseq
        %v228 = vshrl.u32 %v227, 7
        %v229 = vsub.s32 0, %v228
        %v230 = vrot.slane %v225, %v229
        %vm232 = vcmask 261120
        %v234 = vsel %vm232, %v220, 0
        %236 = vmatprep.subr.mxu0 0.0
        %237 = vmatpush1.msra.mxu0 %v221
        %238 = vmatprep.subr.mxu0 0.0
        %239 = vmatpush1.msra.mxu0 %v222
        %240 = vmatprep.subr.mxu0 0.0
        %241 = vmatpush1.msra.mxu0 %v223
        %242 = vmatprep.subr.mxu0 0.0
        %243 = vmatpush1.msra.mxu0 %v224
        %244 = vmatprep.subr.mxu0 0.0
        %245 = vmatpush1.msra.mxu0 0.0
        %246 = vmatprep.subr.mxu0 0.0
        %247 = vmatpush1.msra.mxu0 0.0
        %248 = vmatprep.subr.mxu0 0.0
        %249 = vmatpush1.msra.mxu0 0.0
        %250 = vmatprep.subr.mxu0 0.0
        %251 = vmatpush1.msra.mxu0 0.0
        %252 = vmatprep.subr.mxu0 0.0
        %253 = vmatpush1.msra.mxu0 0.0
        %254 = vmatprep.subr.mxu0 0.0
        %255 = vmatpush1.msra.mxu0 0.0
        %256 = vmatprep.subr.mxu0 0.0
        %257 = vmatpush1.msra.mxu0 0.0
        %258 = vmatprep.subr.mxu0 0.0
        %259 = vmatpush1.msra.mxu0 0.0
        %260 = vmatprep.subr.mxu0 0.0
        %261 = vmatpush1.msra.mxu0 0.0
        %262 = vmatprep.subr.mxu0 0.0
        %263 = vmatpush1.msra.mxu0 0.0
        %264 = vmatprep.subr.mxu0 0.0
        %265 = vmatpush1.msra.mxu0 0.0
        %266 = vmatprep.subr.mxu0 0.0
        %267 = vmatpush1.msra.mxu0 0.0
        %268 = vmatprep.subr.mxu0 0.0
        %269 = vmatpush1.msra.mxu0 0.0
        %270 = vmatprep.subr.mxu0 0.0
        %271 = vmatpush1.msra.mxu0 0.0
        %272 = vmatprep.subr.mxu0 0.0
        %273 = vmatpush1.msra.mxu0 0.0
        %274 = vmatprep.subr.mxu0 0.0
        %275 = vmatpush1.msra.mxu0 0.0
        %276 = vmatprep.subr.mxu0 0.0
        %277 = vmatpush1.msra.mxu0 0.0
        %278 = vmatprep.subr.mxu0 0.0
        %279 = vmatpush1.msra.mxu0 0.0
        %280 = vmatprep.subr.mxu0 0.0
        %281 = vmatpush1.msra.mxu0 0.0
        %282 = vmatprep.subr.mxu0 0.0
        %283 = vmatpush1.msra.mxu0 0.0
        %284 = vmatprep.subr.mxu0 0.0
        %285 = vmatpush1.msra.mxu0 0.0
        %286 = vmatprep.subr.mxu0 0.0
        %287 = vmatpush1.msra.mxu0 0.0
        %288 = vmatprep.subr.mxu0 0.0
        %289 = vmatpush1.msra.mxu0 0.0
        %290 = vmatprep.subr.mxu0 0.0
        %291 = vmatpush1.msra.mxu0 0.0
        %292 = vmatprep.subr.mxu0 0.0
        %293 = vmatpush1.msra.mxu0 0.0
        %294 = vmatprep.subr.mxu0 0.0
        %295 = vmatpush1.msra.mxu0 0.0
        %296 = vmatprep.subr.mxu0 0.0
        %297 = vmatpush1.msra.mxu0 0.0
        %298 = vmatprep.subr.mxu0 0.0
        %299 = vmatpush1.msra.mxu0 0.0
        %300 = vmatprep.mubr.f32.mxu0 0.0
        %301 = vmatmul.mubr.f32.gmra.mrb[0].mxu0 %v234
        %v302 = vpop.f32.mrb[0].mxu0
        %v303 = vadd.f32 %v230, %v302
        %v304 = vpop.f32.mrb[0].mxu0
        %305 = vdwg.mxu0
        %v306 = vmul.f32 %v303, 0.5
        %v307 = vmul.f32 %v303, %v303
        %v308 = vmul.f32 %v307, %v303
        %v309 = vmul.f32 %v308, 0.044715
        %v310 = vadd.f32 %v303, %v309
        %v311 = vmul.f32 %v310, 0.7978846
        %v312 = vtanh.pop %v311
        %v313 = vadd.f32 %v312, 1.0
        %v314 = vmul.f32 %v306, %v313
        %v315 = vld [vmem:[%s3] sm:$0xff]
        %v316 = vld [vmem:[%s3 + $0x8] sm:$0xff]
        %v317 = vld [vmem:[%s3 + $0x10] sm:$0xff]
        %v318 = vld [vmem:[%s3 + $0x18] sm:$0xff]
        %v319 = vld [vmem:[%s3 + $0x20] sm:$0xff]
        %v320 = vld [vmem:[%s3 + $0x28] sm:$0xff]
        %v321 = vld [vmem:[%s3 + $0x30] sm:$0xff]
        %v322 = vld [vmem:[%s3 + $0x38] sm:$0xff]
        %v323 = vld [vmem:[%s3 + $0x40] sm:$0xff]
        %v324 = vld [vmem:[%s3 + $0x48] sm:$0xff]
        %v325 = vld [vmem:[%s3 + $0x50] sm:$0xff]
        %v326 = vld [vmem:[%s3 + $0x58] sm:$0xff]
        %v327 = vld [vmem:[%s3 + $0x60] sm:$0xff]
        %v328 = vld [vmem:[%s3 + $0x68] sm:$0xff]
        %v329 = vld [vmem:[%s3 + $0x70] sm:$0xff]
        %v330 = vld [vmem:[%s3 + $0x78] sm:$0xff]
        %v331 = vld [vmem:[%s4] sm:$0x1]
        %v333 = vlaneseq
        %v334 = vshrl.u32 %v333, 7
        %v335 = vsub.s32 0, %v334
        %v336 = vrot.slane %v331, %v335
        %338 = vmatprep.subr.mxu0 0.0
        %339 = vmatpush1.msra.mxu0 %v315
        %340 = vmatprep.subr.mxu0 0.0
        %341 = vmatpush1.msra.mxu0 %v316
        %342 = vmatprep.subr.mxu0 0.0
        %343 = vmatpush1.msra.mxu0 %v317
        %344 = vmatprep.subr.mxu0 0.0
        %345 = vmatpush1.msra.mxu0 %v318
        %346 = vmatprep.subr.mxu0 0.0
        %347 = vmatpush1.msra.mxu0 %v319
        %348 = vmatprep.subr.mxu0 0.0
        %349 = vmatpush1.msra.mxu0 %v320
        %350 = vmatprep.subr.mxu0 0.0
        %351 = vmatpush1.msra.mxu0 %v321
        %352 = vmatprep.subr.mxu0 0.0
        %353 = vmatpush1.msra.mxu0 %v322
        %354 = vmatprep.subr.mxu0 0.0
        %355 = vmatpush1.msra.mxu0 %v323
        %356 = vmatprep.subr.mxu0 0.0
        %357 = vmatpush1.msra.mxu0 %v324
        %358 = vmatprep.subr.mxu0 0.0
        %359 = vmatpush1.msra.mxu0 %v325
        %360 = vmatprep.subr.mxu0 0.0
        %361 = vmatpush1.msra.mxu0 %v326
        %362 = vmatprep.subr.mxu0 0.0
        %363 = vmatpush1.msra.mxu0 %v327
        %364 = vmatprep.subr.mxu0 0.0
        %365 = vmatpush1.msra.mxu0 %v328
        %366 = vmatprep.subr.mxu0 0.0
        %367 = vmatpush1.msra.mxu0 %v329
        %368 = vmatprep.subr.mxu0 0.0
        %369 = vmatpush1.msra.mxu0 %v330
        %370 = vmatprep.subr.mxu0 0.0
        %371 = vmatpush1.msra.mxu0 0.0
        %372 = vmatprep.subr.mxu0 0.0
        %373 = vmatpush1.msra.mxu0 0.0
        %374 = vmatprep.subr.mxu0 0.0
        %375 = vmatpush1.msra.mxu0 0.0
        %376 = vmatprep.subr.mxu0 0.0
        %377 = vmatpush1.msra.mxu0 0.0
        %378 = vmatprep.subr.mxu0 0.0
        %379 = vmatpush1.msra.mxu0 0.0
        %380 = vmatprep.subr.mxu0 0.0
        %381 = vmatpush1.msra.mxu0 0.0
        %382 = vmatprep.subr.mxu0 0.0
        %383 = vmatpush1.msra.mxu0 0.0
        %384 = vmatprep.subr.mxu0 0.0
        %385 = vmatpush1.msra.mxu0 0.0
        %386 = vmatprep.subr.mxu0 0.0
        %387 = vmatpush1.msra.mxu0 0.0
        %388 = vmatprep.subr.mxu0 0.0
        %389 = vmatpush1.msra.mxu0 0.0
        %390 = vmatprep.subr.mxu0 0.0
        %391 = vmatpush1.msra.mxu0 0.0
        %392 = vmatprep.subr.mxu0 0.0
        %393 = vmatpush1.msra.mxu0 0.0
        %394 = vmatprep.subr.mxu0 0.0
        %395 = vmatpush1.msra.mxu0 0.0
        %396 = vmatprep.subr.mxu0 0.0
        %397 = vmatpush1.msra.mxu0 0.0
        %398 = vmatprep.subr.mxu0 0.0
        %399 = vmatpush1.msra.mxu0 0.0
        %400 = vmatprep.subr.mxu0 0.0
        %401 = vmatpush1.msra.mxu0 0.0
        %402 = vmatprep.mubr.f32.mxu0 0.0
        %403 = vmatmul.mubr.f32.gmra.mrb[0].mxu0 %v314
        %v404 = vpop.f32.mrb[0].mxu0
        %v405 = vadd.f32 %v336, %v404
        %v406 = vpop.f32.mrb[0].mxu0
        %407 = vdwg.mxu0
        %408 = vst.msk [vmem:[%s215] sm:$0xff] %vm232, %v405
        %s409 = sand.u32 %s137, 1
        %s410 = scalar_lea.sflag [#allocation3], %s409
        %s411 = sand.u32 %s137, 1
        %s412 = smul.addr %s411, 8
        %s413 = scalar_lea.vmem [#allocation2], %s412
        // Predicated region
        $region41: #{tpu_custom_call.1} parent=39 // pred_check
          %p414 = pneg %p147
        $region42: #{tpu_custom_call.1} parent=39 // pred_check_branch
          %416 = sbr.rel (%p414) target = $region44
        $region43: #{tpu_custom_call.1} parent=39 // pred_region
          %s418 = ssub.s32 128, 128
          %419 = vsyncadd %s410, %s418
          %s420 = smul.addr %s19, 128
          %s421 = scalar_lea.hbm %s5, %s420
          %s423 = sshll.u32 %s413, 4
          %s424 = int_to_ptr.vmem [resolvable:$true] %s423
          %426 = dma.vmem_to_hbm [thread:$0]  %s424, 128, %s421, %s410
        $region44: #{tpu_custom_call.1} parent=39 // pred_fallthru
          _
      $region40: #{tpu_custom_call.1} parent=5 // pred_fallthru
        _
      %p427 = scmp.le.s32.totalorder 2, %s14
      // Predicated region
      $region45: #{tpu_custom_call.1} parent=5 // pred_check
        %p428 = pneg %p427
      $region46: #{tpu_custom_call.1} parent=5 // pred_check_branch
        %430 = sbr.rel (%p428) target = $region48
      $region47: #{tpu_custom_call.1} parent=5 // pred_region
        %s431 = ssub.s32 %s14, 2
        // Predicated region
        $region49: #{tpu_custom_call.1} parent=47 // pred_check
          %p432 = pneg %p153
        $region50: #{tpu_custom_call.1} parent=47 // pred_check_branch
          %434 = sbr.rel (%p432) target = $region52
        $region51: #{tpu_custom_call.1} parent=47 // pred_region
          %s435 = sand.u32 %s138, 1
          %s436 = scalar_lea.sflag [#allocation3], %s435
          %s437 = sand.u32 %s138, 1
          %s438 = smul.addr %s437, 8
          %s439 = scalar_lea.vmem [#allocation2], %s438
          %440 = dma.done %s436, 128
        $region52: #{tpu_custom_call.1} parent=47 // pred_fallthru
          _
      $region48: #{tpu_custom_call.1} parent=5 // pred_fallthru
        _
    $region6: #{tpu_custom_call.1} parent=1 // loop_footer
      %s18 = sadd.s32 1, %s14
    $region7: #{tpu_custom_call.1} parent=1 // loop_footer_branch
      %13 = sbr.rel target = $region3
    $region8: #{tpu_custom_call.1} parent=1 // loop_exit
      _
    %441 = vsyncpa [#allocation3], 1
    %s442 = scalar_lea.sflag [#allocation3], 1
    %443 = vsyncpa %s442, 1

</llo_original>
